<compile_context>
chip_gen: v6e
topology: v6e:2x2x1
jax: 0.10.0
libtpu: 0.0.40
codegen_flags: <defaults>
</compile_context>

<pallas_src>
from functools import partial

import jax
import jax.numpy as jnp
from jax.experimental import pallas as pl
from jax.experimental.pallas import tpu as pltpu

_T_CHUNK = 512  # lanes of T cast to f32 per reduction step


def _spike_rate_plus_kernel(spike_ref, target_ref, partial_ref, *,
                            inv_t, num_rows, tile_rows):
    # spike_ref:   (tile_rows, T) native dtype, VMEM
    # target_ref:  (tile_rows, 1) f32, VMEM
    # partial_ref: (1, 1) f32, SMEM -- this tile's sum of squared errors
    t = spike_ref.shape[-1]

    # Chunked time reduction: never materialize the whole tile in f32.
    acc = jnp.zeros((tile_rows, 1), jnp.float32)
    start = 0
    while start < t:
        size = min(_T_CHUNK, t - start)
        chunk = spike_ref[:, start:start + size].astype(jnp.float32)
        acc = acc + jnp.sum(chunk, axis=-1, keepdims=True)
        start += size

    rate = acc * inv_t                          # (tile_rows, 1) spike rate
    diff = rate - target_ref[...]

    # Mask rows past the end of the (N*C) array: the last partial block reads
    # unspecified data; jnp.where also guards against NaN garbage.
    row_ids = (pl.program_id(0) * tile_rows
               + jax.lax.broadcasted_iota(jnp.int32, (tile_rows, 1), 0))
    sq = jnp.where(row_ids < num_rows, diff * diff, 0.0)
    partial_ref[0, 0] = jnp.sum(sq)


def _choose_tile_rows(num_rows, t, itemsize, *, vmem_budget=24 << 20,
                      max_spike_bytes=8 << 20):
    """Row-tile size: multiple of the sublane pack, sized against *real* VMEM."""
    pack = 8 * max(1, 4 // max(1, itemsize))        # 8 f32 / 16 bf16 / 32 int8
    t_pad = -(-t // 128) * 128                      # lane padding of the T dim
    # Per-row VMEM: 2x double-buffered spike + 2x target (lane padded)
    # + chunked f32 cast temporary + f32 accumulator.
    per_row = (2 * t_pad * itemsize + 2 * 128 * 4
               + min(t_pad, _T_CHUNK) * 4 + 128 * 4)
    tile = min(vmem_budget // per_row,
               max(1, max_spike_bytes // max(1, t_pad * itemsize)))
    tile = max(pack, (int(tile) // pack) * pack)
    rows_ceil = -(-num_rows // pack) * pack
    tile = min(tile, rows_ceil)
    # Use >=2 grid steps when possible so both v7x TensorCores (and their share
    # of the 3.2 TB/s HBM bandwidth) are engaged; harmless on v5e/v6e.
    if tile >= num_rows and num_rows > pack:
        half = -(-num_rows // 2)
        tile = min(tile, -(-half // pack) * pack)
    return int(tile), int(per_row)


def spike_rate_plus(spike, event_rate, labels, *, true_rate, false_rate,
                    max_rate=0.3, tile_rows=None):
    """Pallas implementation of SpikeRatePlus.forward(([spike, event_rate], labels))."""
    if max_rate > 1:
        raise AssertionError(
            f"Expected max rate to be between 0 and 1. Found {max_rate}")

    n, c, t = spike.shape
    num_rows = n * c
    itemsize = jnp.dtype(spike.dtype).itemsize

    auto_tile, per_row_vmem = _choose_tile_rows(num_rows, t, itemsize)
    if tile_rows is None:
        tile_rows = auto_tile
    tile_rows = max(8, (int(tile_rows) // 8) * 8)    # sublane-aligned
    num_tiles = -(-num_rows // tile_rows)

    # Free reshape (merges leading dims): per-tile HBM reads are contiguous.
    spike2d = spike.reshape(num_rows, t)

    # Tiny per-row target stream (~1/T of the spike traffic).
    onehot = (labels.astype(jnp.int32).reshape(n, 1)
              == jnp.arange(c, dtype=jnp.int32)[None, :]).astype(jnp.float32)
    target = (float(true_rate) * onehot
              + float(false_rate) * (1.0 - onehot)).reshape(num_rows, 1)

    kernel = partial(_spike_rate_plus_kernel,
                     inv_t=1.0 / float(t),
                     num_rows=num_rows,
                     tile_rows=tile_rows)

    # Working set + headroom; capped well under v7x's 64 MiB physical VMEM.
    vmem_limit = int(min(56 << 20,
                         max(32 << 20, tile_rows * per_row_vmem + (6 << 20))))

    partials = pl.pallas_call(
        kernel,
        out_shape=jax.ShapeDtypeStruct((num_tiles, 1), jnp.float32),
        grid=(num_tiles,),
        in_specs=[
            # spike tile, native dtype, contiguous HBM rows, auto double-buffered
            pl.BlockSpec((tile_rows, t), lambda i: (i, 0)),
            # precomputed per-row target rate
            pl.BlockSpec((tile_rows, 1), lambda i: (i, 0)),
        ],
        out_specs=pl.BlockSpec((1, 1), lambda i: (i, 0),
                               memory_space=pltpu.MemorySpace.SMEM),
        compiler_params=pltpu.CompilerParams(
            dimension_semantics=("parallel",),
            vmem_limit_bytes=vmem_limit),
    )(spike2d, target)

    # Tail reduction over a handful of partials + scalar penalty: free in XLA.
    loss_1 = jnp.sum(partials)
    # Event-rate penalty stays elementwise, exactly as the PyTorch forward.
    loss_2 = jnp.abs(jnp.asarray(event_rate, jnp.float32)
                     - jnp.float32(max_rate)) ** 2 * 0.5
    return loss_1 + loss_2


def _reference(spike, event_rate, labels, *, true_rate, false_rate, max_rate):
    """Pure-JAX reference mirroring the PyTorch/slayer semantics."""
    rate = jnp.mean(spike.astype(jnp.float32), axis=-1)                  # (N, C)
    onehot = jax.nn.one_hot(labels, spike.shape[1], dtype=jnp.float32)   # (N, C)
    target = true_rate * onehot + false_rate * (1.0 - onehot)
    loss_1 = jnp.sum((rate - target) ** 2)
    loss_2 = jnp.abs(jnp.asarray(event_rate, jnp.float32) - max_rate) ** 2 / 2.0
    return loss_1 + loss_2


if __name__ == "__main__":
    key = jax.random.PRNGKey(0)
    k1, k2, k3, k4, k5, k6, k7, k8, k9 = jax.random.split(key, 9)

    true_rate, false_rate, max_rate = 0.9, 0.05, 0.3

    # Case 1: tiny shapes consistent with the module (batch=2, classes=4, time=16).
    N, C, T = 2, 4, 16
    spike = jax.random.bernoulli(k1, p=0.25, shape=(N, C, T)).astype(jnp.float32)
    labels = jax.random.randint(k2, (N,), 0, C, dtype=jnp.int32)
    event_rate = jax.random.uniform(k3, (), jnp.float32)

    out = spike_rate_plus(spike, event_rate, labels, true_rate=true_rate,
                          false_rate=false_rate, max_rate=max_rate)
    out = jax.block_until_ready(out)
    ref = _reference(spike, event_rate, labels, true_rate=true_rate,
                     false_rate=false_rate, max_rate=max_rate)
    assert jnp.allclose(out, ref, rtol=1e-5, atol=1e-5), (out, ref)

    # Case 2: int8 binary spikes (halves HBM traffic vs bf16), multi-tile grid
    # with an in-kernel masked row tail (N*C = 120 rows -> 2 grid steps of 64).
    N2, C2, T2 = 12, 10, 32
    spike2 = jax.random.bernoulli(k4, p=0.2, shape=(N2, C2, T2)).astype(jnp.int8)
    labels2 = jax.random.randint(k5, (N2,), 0, C2, dtype=jnp.int32)
    event_rate2 = jax.random.uniform(k6, (), jnp.float32)

    out2 = spike_rate_plus(spike2, event_rate2, labels2, true_rate=true_rate,
                           false_rate=false_rate, max_rate=max_rate)
    out2 = jax.block_until_ready(out2)
    ref2 = _reference(spike2, event_rate2, labels2, true_rate=true_rate,
                      false_rate=false_rate, max_rate=max_rate)
    assert jnp.allclose(out2, ref2, rtol=1e-5, atol=1e-5), (out2, ref2)

    # Case 3: bf16 spikes, row count not a multiple of the sublane pack, explicit
    # small tile to force >1 grid step and exercise the tail mask (20 rows, tile 16).
    N3, C3, T3 = 5, 4, 48
    spike3 = jax.random.bernoulli(k7, p=0.3, shape=(N3, C3, T3)).astype(jnp.bfloat16)
    labels3 = jax.random.randint(k8, (N3,), 0, C3, dtype=jnp.int32)
    event_rate3 = jax.random.uniform(k9, (), jnp.float32)

    out3 = spike_rate_plus(spike3, event_rate3, labels3, true_rate=true_rate,
                           false_rate=false_rate, max_rate=max_rate, tile_rows=16)
    out3 = jax.block_until_ready(out3)
    ref3 = _reference(spike3, event_rate3, labels3, true_rate=true_rate,
                      false_rate=false_rate, max_rate=max_rate)
    assert jnp.allclose(out3, ref3, rtol=1e-5, atol=1e-5), (out3, ref3)

    print("KERNEL_OK")
</pallas_src>

<mosaic_0001>
module attributes {stable_mosaic.version = 11 : i64} {
  func.func @_spike_rate_plus_kernel(%arg0: i32, %arg1: memref<8x16xf32, #tpu.memory_space<vmem>>, %arg2: memref<8x1xf32, #tpu.memory_space<vmem>>, %arg3: memref<1x1xf32, #tpu.memory_space<smem>>) attributes {dimension_semantics = [#tpu.dimension_semantics<parallel>], iteration_bounds = array<i64: 1>, scalar_prefetch = 0 : i64, scratch_operands = 0 : i64, tpu.core_type = #tpu.core_type<tc>, window_params = [{transform_indices = @transform_0, window_bounds = array<i64: 8, 16>}, {transform_indices = @transform_1, window_bounds = array<i64: 8, 1>}, {transform_indices = @transform_2, window_bounds = array<i64: 1, 1>}]} {
    %cst = arith.constant 0.000000e+00 : f32
    %0 = vector.broadcast %cst : f32 to vector<8x1xf32>
    %c0 = arith.constant 0 : index
    %c0_0 = arith.constant 0 : index
    %1 = vector.load %arg1[%c0, %c0_0] : memref<8x16xf32, #tpu.memory_space<vmem>>, vector<8x16xf32>
    %cst_1 = arith.constant dense<0.000000e+00> : vector<8xf32>
    %2 = vector.multi_reduction <add>, %1, %cst_1 [1] : vector<8x16xf32> to vector<8xf32>
    %3 = vector.shape_cast %2 : vector<8xf32> to vector<8x1xf32>
    %4 = arith.addf %0, %3 : vector<8x1xf32>
    %cst_2 = arith.constant 6.250000e-02 : f32
    %5 = vector.broadcast %cst_2 : f32 to vector<8x1xf32>
    %6 = arith.mulf %4, %5 : vector<8x1xf32>
    %c0_3 = arith.constant 0 : index
    %c0_4 = arith.constant 0 : index
    %7 = vector.load %arg2[%c0_3, %c0_4] : memref<8x1xf32, #tpu.memory_space<vmem>>, vector<8x1xf32>
    %8 = arith.subf %6, %7 : vector<8x1xf32>
    %c8_i32 = arith.constant 8 : i32
    %9 = arith.muli %arg0, %c8_i32 : i32
    %10 = tpu.iota {dimensions = array<i32: 0>} : vector<8x1xi32>
    %11 = vector.broadcast %9 : i32 to vector<8x1xi32>
    %12 = arith.addi %11, %10 : vector<8x1xi32>
    %c8_i32_5 = arith.constant 8 : i32
    %13 = vector.broadcast %c8_i32_5 : i32 to vector<8x1xi32>
    %14 = arith.cmpi slt, %12, %13 : vector<8x1xi32>
    %15 = arith.mulf %8, %8 : vector<8x1xf32>
    %cst_6 = arith.constant 0.000000e+00 : f32
    %16 = vector.broadcast %cst_6 : f32 to vector<8x1xf32>
    %17 = arith.select %14, %15, %16 : vector<8x1xi1>, vector<8x1xf32>
    %18 = vector.shape_cast %17 : vector<8x1xf32> to vector<1x8x1xf32>
    %cst_7 = arith.constant dense<0.000000e+00> : vector<1xf32>
    %19 = vector.multi_reduction <add>, %18, %cst_7 [1, 2] : vector<1x8x1xf32> to vector<1xf32>
    %20 = vector.shape_cast %19 : vector<1xf32> to vector<1x1x1xf32>
    %21 = vector.extract %20[0, 0, 0] : f32 from vector<1x1x1xf32>
    %c0_8 = arith.constant 0 : index
    %c0_9 = arith.constant 0 : index
    %22 = memref.load %arg3[%c0_8, %c0_9] : memref<1x1xf32, #tpu.memory_space<smem>>
    memref.store %21, %arg3[%c0_8, %c0_9] : memref<1x1xf32, #tpu.memory_space<smem>>
    return
  }
  func.func @transform_0(%arg0: i32) -> (i32, i32) {
    %c0_i32 = arith.constant 0 : i32
    %c0_i32_0 = arith.constant 0 : i32
    return %arg0, %c0_i32 : i32, i32
  }
  func.func @transform_1(%arg0: i32) -> (i32, i32) {
    %c0_i32 = arith.constant 0 : i32
    %c0_i32_0 = arith.constant 0 : i32
    return %arg0, %c0_i32 : i32, i32
  }
  func.func @transform_2(%arg0: i32) -> (i32, i32) {
    %c0_i32 = arith.constant 0 : i32
    %c0_i32_0 = arith.constant 0 : i32
    return %arg0, %c0_i32 : i32, i32
  }
}

</mosaic_0001>

<llo_original>
// kernel: tpu_custom_call.1
$region0: #{tpu_custom_call.1}
  #allocation0 [shape = 'u32[]', space=smem, size = 0x4, offset = 0x4, fixed_abs, tag = 'smem constant byte address 0x4 - core index']
  #allocation1 [shape = 'u32[144,128]{1,0:T(1,128)}', space=vmem, size = 0x12000, scoped, tag = 'internal scratch']
  %s0 = inlined_call_operand.vmem [shape: f32[8,16], index: 0, kind: input, shape index: {}]
  %s1 = inlined_call_operand.vmem [shape: f32[8,1], index: 1, kind: input, shape index: {}]
  %s2 = inlined_call_operand.hbm [shape: f32[1,1], index: 2, kind: output, shape index: {}]
  %s3 = sld [smem:[#allocation0]]
  $region18: #{tpu_custom_call.1} parent=0
    _
  %s5 = ssub.s32 1, %s3
  %s6 = scalar_select 0, %s5, %s3
  $region1: #{tpu_custom_call.1} parent=0
    #allocation2 [shape = 'u8[512]{0}', space=smem, size = 0x200, scoped, tag = 'output window, operand 0, single buffered']
    #allocation3 [shape = 's32[1]{0}', space=sflag, size = 0x4, scoped, tag = 'scoped memory for tpu_custom_call.1']
    %7 = vsyncpa [#allocation3], 0
    // Predicated region
    $region2: #{tpu_custom_call.1} parent=1 // pred_check
      _
    $region3: #{tpu_custom_call.1} parent=1 // pred_check_branch
      %9 = sbr.rel (0) target = $region5
    $region4: #{tpu_custom_call.1} parent=1 // pred_region
      _
    $region5: #{tpu_custom_call.1} parent=1 // pred_fallthru
      _
    // Predicated region
    $region6: #{tpu_custom_call.1} parent=1 // pred_check
      _
    $region7: #{tpu_custom_call.1} parent=1 // pred_check_branch
      %11 = sbr.rel (0) target = $region9
    $region8: #{tpu_custom_call.1} parent=1 // pred_region
      _
    $region9: #{tpu_custom_call.1} parent=1 // pred_fallthru
      _
    %v12 = vld [vmem:[%s0] sm:$0xff]
    %vm13 = vcmask 130048
    %v14 = vsel %vm13, %v12, 0.0
    %15 = vadd.xlane.f32.xlu0 %v14
    %v16 = vpop.xlane.xlu0 %15
    %v17 = vadd.f32 %v16, 0.0
    %v18 = vmul.f32 %v17, 0.0625
    %v19 = vld [vmem:[%s1] sm:$0xff]
    %v20 = vsub.f32 %v18, %v19
    %s21 = smul.u32 0, 8
    %v22 = vlaneseq
    %v23 = vshrl.u32 %v22, 7
    %v24 = vstv %s21
    %v25 = vadd.s32 %v24, %v23
    %vm26 = vcmp.lt.s32.totalorder %v25, 8
    %v27 = vmul.f32 %v20, %v20
    %v28 = vsel %vm26, %v27, 0.0
    %vm29 = vcmask 7168
    %v30 = vsel %vm29, %v28, 0.0
    %31 = vadd.xlane.f32.xlu0 %v30
    %v32 = vpop.xlane.xlu0 %31
    %v33 = vrot.slane %v32, 4
    %v34 = vadd.f32 %v32, %v33
    %v35 = vrot.slane %v34, 2
    %v36 = vadd.f32 %v34, %v35
    %v37 = vrot.slane %v36, 1
    %v38 = vadd.f32 %v36, %v37
    %s39 = vtos %v38
    %s40 = scalar_lea.smem [#allocation2], 0
    %41 = sst [smem:[%s40]] %s39
    // Predicated region
    $region10: #{tpu_custom_call.1} parent=1 // pred_check
      _
    $region11: #{tpu_custom_call.1} parent=1 // pred_check_branch
      %43 = sbr.rel (0) target = $region13
    $region12: #{tpu_custom_call.1} parent=1 // pred_region
      %s45 = ssub.s32 16, 16
      %46 = vsyncadd [#allocation3], %s45
      %49 = dma.smem_to_hbm [#allocation2], 16, %s2, [#allocation3]
    $region13: #{tpu_custom_call.1} parent=1 // pred_fallthru
      _
    // Predicated region
    $region14: #{tpu_custom_call.1} parent=1 // pred_check
      _
    $region15: #{tpu_custom_call.1} parent=1 // pred_check_branch
      %51 = sbr.rel (0) target = $region17
    $region16: #{tpu_custom_call.1} parent=1 // pred_region
      %52 = dma.done [#allocation3], 16
    $region17: #{tpu_custom_call.1} parent=1 // pred_fallthru
      _
    %53 = sfence
    %54 = vsyncpa [#allocation3], 1

</llo_original>
